<compile_context>
chip_gen: v7x
topology: tpu7x:2x2x1
jax: 0.10.0
libtpu: 0.0.40
codegen_flags: <defaults>
</compile_context>

<pallas_src>
import functools
import math

import jax
import jax.numpy as jnp
from jax.experimental import pallas as pl
from jax.experimental.pallas import tpu as pltpu

LANE = 128      # vreg lane width (last dim)
SUBLANE = 8     # f32 sublane count (second-to-last dim)


def _round_up(n, m):
    return ((n + m - 1) // m) * m


@functools.partial(jax.jit, static_argnames=("matmul_dtype", "max_tile_b"))
def mlp_forward(x, weights, biases, *, matmul_dtype=jnp.float32, max_tile_b=512):
    """MLP forward pass: tanh after every layer except the last.

    x:        (B, D_in) float32
    weights:  list of (D_i, D_{i+1}) float32   (already transposed vs torch)
    biases:   list of (1, D_{i+1}) float32
    """
    n_layers = len(weights)
    batch, in_dim = x.shape
    out_dim = weights[-1].shape[1]

    # ---- lane-align all feature dims (pad to multiples of 128) -------------
    dims = [in_dim] + [w.shape[1] for w in weights]
    pdims = [_round_up(d, LANE) for d in dims]

    x_p = jnp.pad(x, ((0, 0), (0, pdims[0] - in_dim)))
    weights_p = [
        jnp.pad(w, ((0, pdims[i] - w.shape[0]), (0, pdims[i + 1] - w.shape[1])))
        for i, w in enumerate(weights)
    ]
    biases_p = [
        jnp.pad(b, ((0, 0), (0, pdims[i + 1] - b.shape[1])))
        for i, b in enumerate(biases)
    ]

    # ---- pick TILE_B against a VMEM budget sized for v7x (64 MiB) ----------
    resident = 4 * (sum(w.size for w in weights_p) + sum(b.size for b in biases_p))
    budget = 40 * 1024 * 1024  # headroom under v7x's 64 MiB physical VMEM

    def tile_bytes(tb):
        io = 2 * tb * pdims[0] * 4 + 2 * tb * pdims[-1] * 4   # double-buffered x / out
        hid = 2 * tb * max(pdims) * 4                         # live hidden slabs
        return io + hid

    tile_b = _round_up(min(max_tile_b, _round_up(batch, SUBLANE)), SUBLANE)
    while tile_b > SUBLANE and resident + tile_bytes(tile_b) > budget:
        tile_b = max(SUBLANE, _round_up(tile_b // 2, SUBLANE))

    b_pad = _round_up(batch, tile_b)
    x_p = jnp.pad(x_p, ((0, b_pad - batch), (0, 0)))

    # ---- kernel -------------------------------------------------------------
    def kernel(*refs):
        # refs = (x_ref, w0, b0, w1, b1, ..., w_{n-1}, b_{n-1}, o_ref)
        x_ref = refs[0]
        o_ref = refs[-1]
        h = x_ref[...]                       # f32, already padded / lane-dense
        for i in range(n_layers):
            w = refs[1 + 2 * i][...]
            b = refs[2 + 2 * i][...]
            h = jnp.dot(h.astype(matmul_dtype), w.astype(matmul_dtype),
                        preferred_element_type=jnp.float32) + b
            if i < n_layers - 1:
                h = jnp.tanh(h)              # EUP slot; hidden under MXU work
        o_ref[...] = h.astype(o_ref.dtype)

    # ---- BlockSpecs: batch-tiled x/out, VMEM-resident weights & biases ------
    in_specs = [pl.BlockSpec((tile_b, pdims[0]), lambda i: (i, 0))]
    for li in range(n_layers):
        in_specs.append(pl.BlockSpec((pdims[li], pdims[li + 1]), lambda i: (0, 0)))
        in_specs.append(pl.BlockSpec((1, pdims[li + 1]), lambda i: (0, 0)))
    out_spec = pl.BlockSpec((tile_b, pdims[-1]), lambda i: (i, 0))

    flat_wb = [t for pair in zip(weights_p, biases_p) for t in pair]

    out_p = pl.pallas_call(
        kernel,
        out_shape=jax.ShapeDtypeStruct((b_pad, pdims[-1]), jnp.float32),
        grid=(b_pad // tile_b,),
        in_specs=in_specs,
        out_specs=out_spec,
        compiler_params=pltpu.CompilerParams(
            dimension_semantics=("parallel",),      # split across v7x's dual TC
            vmem_limit_bytes=48 * 1024 * 1024,
        ),
    )(x_p, *flat_wb)

    # slice away batch / lane padding
    return out_p[:batch, :out_dim]


def init_mlp_params(key, input_size, intermediates, output_size):
    """Deterministic init mirroring torch.nn.Linear defaults:
    weight, bias ~ U(-1/sqrt(fan_in), 1/sqrt(fan_in))."""
    dims = [input_size] + list(intermediates) + [output_size]
    weights, biases = [], []
    for i in range(len(dims) - 1):
        fan_in, fan_out = dims[i], dims[i + 1]
        bound = 1.0 / math.sqrt(fan_in)
        key, kw, kb = jax.random.split(key, 3)
        # Stored directly as (in, out) == W.T relative to torch's (out, in).
        w = jax.random.uniform(kw, (fan_in, fan_out), jnp.float32, -bound, bound)
        b = jax.random.uniform(kb, (1, fan_out), jnp.float32, -bound, bound)
        weights.append(w)
        biases.append(b)
    return weights, biases


def reference_forward(x, weights, biases):
    """Plain-JAX reference for correctness check."""
    h = x
    for i, (w, b) in enumerate(zip(weights, biases)):
        h = h @ w + b
        if i < len(weights) - 1:
            h = jnp.tanh(h)
    return h


if __name__ == "__main__":
    key = jax.random.PRNGKey(0)

    input_size = 6
    intermediates = [32, 32]
    output_size = 1
    batch = 8

    kx, kp = jax.random.split(key)
    x = jax.random.normal(kx, (batch, input_size), jnp.float32)
    weights, biases = init_mlp_params(kp, input_size, intermediates, output_size)

    out = mlp_forward(x, weights, biases)
    out = jax.block_until_ready(out)

    ref = reference_forward(x, weights, biases)
    assert out.shape == (batch, output_size)
    assert jnp.allclose(out, ref, atol=1e-5, rtol=1e-5)

    print("KERNEL_OK")
</pallas_src>

<mosaic_0001>
module attributes {stable_mosaic.version = 11 : i64} {
  func.func @kernel(%arg0: i32, %arg1: memref<8x128xf32, #tpu.memory_space<vmem>>, %arg2: memref<128x128xf32, #tpu.memory_space<vmem>>, %arg3: memref<1x128xf32, #tpu.memory_space<vmem>>, %arg4: memref<128x128xf32, #tpu.memory_space<vmem>>, %arg5: memref<1x128xf32, #tpu.memory_space<vmem>>, %arg6: memref<128x128xf32, #tpu.memory_space<vmem>>, %arg7: memref<1x128xf32, #tpu.memory_space<vmem>>, %arg8: memref<8x128xf32, #tpu.memory_space<vmem>>) attributes {dimension_semantics = [#tpu.dimension_semantics<parallel>], iteration_bounds = array<i64: 1>, scalar_prefetch = 0 : i64, scratch_operands = 0 : i64, tpu.core_type = #tpu.core_type<tc>, window_params = [{transform_indices = @transform_0, window_bounds = array<i64: 8, 128>}, {pipeline_mode = #tpu.pipeline_mode<synchronous>, transform_indices = @transform_1, window_bounds = array<i64: 128, 128>}, {pipeline_mode = #tpu.pipeline_mode<synchronous>, transform_indices = @transform_2, window_bounds = array<i64: 1, 128>}, {pipeline_mode = #tpu.pipeline_mode<synchronous>, transform_indices = @transform_3, window_bounds = array<i64: 128, 128>}, {pipeline_mode = #tpu.pipeline_mode<synchronous>, transform_indices = @transform_4, window_bounds = array<i64: 1, 128>}, {pipeline_mode = #tpu.pipeline_mode<synchronous>, transform_indices = @transform_5, window_bounds = array<i64: 128, 128>}, {pipeline_mode = #tpu.pipeline_mode<synchronous>, transform_indices = @transform_6, window_bounds = array<i64: 1, 128>}, {transform_indices = @transform_7, window_bounds = array<i64: 8, 128>}]} {
    %c0 = arith.constant 0 : index
    %c0_0 = arith.constant 0 : index
    %0 = vector.load %arg1[%c0, %c0_0] : memref<8x128xf32, #tpu.memory_space<vmem>>, vector<8x128xf32>
    %c0_1 = arith.constant 0 : index
    %c0_2 = arith.constant 0 : index
    %1 = vector.load %arg2[%c0_1, %c0_2] : memref<128x128xf32, #tpu.memory_space<vmem>>, vector<128x128xf32>
    %c0_3 = arith.constant 0 : index
    %c0_4 = arith.constant 0 : index
    %2 = vector.load %arg3[%c0_3, %c0_4] : memref<1x128xf32, #tpu.memory_space<vmem>>, vector<1x128xf32>
    %cst = arith.constant dense<0.000000e+00> : vector<8x128xf32>
    %3 = tpu.matmul %0, %1, %cst {dimension_numbers = #tpu.dot_dimension_numbers<[1], [0], [0], [1], [0, 0, 1, 1], [], []>} : vector<8x128xf32>, vector<128x128xf32>, vector<8x128xf32> -> vector<8x128xf32>
    %4 = vector.broadcast %2 : vector<1x128xf32> to vector<8x128xf32>
    %5 = arith.addf %3, %4 : vector<8x128xf32>
    %6 = math.tanh %5 : vector<8x128xf32>
    %c0_5 = arith.constant 0 : index
    %c0_6 = arith.constant 0 : index
    %7 = vector.load %arg4[%c0_5, %c0_6] : memref<128x128xf32, #tpu.memory_space<vmem>>, vector<128x128xf32>
    %c0_7 = arith.constant 0 : index
    %c0_8 = arith.constant 0 : index
    %8 = vector.load %arg5[%c0_7, %c0_8] : memref<1x128xf32, #tpu.memory_space<vmem>>, vector<1x128xf32>
    %cst_9 = arith.constant dense<0.000000e+00> : vector<8x128xf32>
    %9 = tpu.matmul %6, %7, %cst_9 {dimension_numbers = #tpu.dot_dimension_numbers<[1], [0], [0], [1], [0, 0, 1, 1], [], []>} : vector<8x128xf32>, vector<128x128xf32>, vector<8x128xf32> -> vector<8x128xf32>
    %10 = vector.broadcast %8 : vector<1x128xf32> to vector<8x128xf32>
    %11 = arith.addf %9, %10 : vector<8x128xf32>
    %12 = math.tanh %11 : vector<8x128xf32>
    %c0_10 = arith.constant 0 : index
    %c0_11 = arith.constant 0 : index
    %13 = vector.load %arg6[%c0_10, %c0_11] : memref<128x128xf32, #tpu.memory_space<vmem>>, vector<128x128xf32>
    %c0_12 = arith.constant 0 : index
    %c0_13 = arith.constant 0 : index
    %14 = vector.load %arg7[%c0_12, %c0_13] : memref<1x128xf32, #tpu.memory_space<vmem>>, vector<1x128xf32>
    %cst_14 = arith.constant dense<0.000000e+00> : vector<8x128xf32>
    %15 = tpu.matmul %12, %13, %cst_14 {dimension_numbers = #tpu.dot_dimension_numbers<[1], [0], [0], [1], [0, 0, 1, 1], [], []>} : vector<8x128xf32>, vector<128x128xf32>, vector<8x128xf32> -> vector<8x128xf32>
    %16 = vector.broadcast %14 : vector<1x128xf32> to vector<8x128xf32>
    %17 = arith.addf %15, %16 : vector<8x128xf32>
    %c0_15 = arith.constant 0 : index
    %c0_16 = arith.constant 0 : index
    %18 = vector.load %arg8[%c0_15, %c0_16] : memref<8x128xf32, #tpu.memory_space<vmem>>, vector<8x128xf32>
    tpu.vector_store %arg8[%c0_15, %c0_16], %17 {strides = array<i32>} : memref<8x128xf32, #tpu.memory_space<vmem>>, vector<8x128xf32>,
    return
  }
  func.func @transform_0(%arg0: i32) -> (i32, i32) {
    %c0_i32 = arith.constant 0 : i32
    %c0_i32_0 = arith.constant 0 : i32
    return %arg0, %c0_i32 : i32, i32
  }
  func.func @transform_1(%arg0: i32) -> (i32, i32) {
    %c0_i32 = arith.constant 0 : i32
    %c0_i32_0 = arith.constant 0 : i32
    %c0_i32_1 = arith.constant 0 : i32
    return %c0_i32, %c0_i32_0 : i32, i32
  }
  func.func @transform_2(%arg0: i32) -> (i32, i32) {
    %c0_i32 = arith.constant 0 : i32
    %c0_i32_0 = arith.constant 0 : i32
    %c0_i32_1 = arith.constant 0 : i32
    return %c0_i32, %c0_i32_0 : i32, i32
  }
  func.func @transform_3(%arg0: i32) -> (i32, i32) {
    %c0_i32 = arith.constant 0 : i32
    %c0_i32_0 = arith.constant 0 : i32
    %c0_i32_1 = arith.constant 0 : i32
    return %c0_i32, %c0_i32_0 : i32, i32
  }
  func.func @transform_4(%arg0: i32) -> (i32, i32) {
    %c0_i32 = arith.constant 0 : i32
    %c0_i32_0 = arith.constant 0 : i32
    %c0_i32_1 = arith.constant 0 : i32
    return %c0_i32, %c0_i32_0 : i32, i32
  }
  func.func @transform_5(%arg0: i32) -> (i32, i32) {
    %c0_i32 = arith.constant 0 : i32
    %c0_i32_0 = arith.constant 0 : i32
    %c0_i32_1 = arith.constant 0 : i32
    return %c0_i32, %c0_i32_0 : i32, i32
  }
  func.func @transform_6(%arg0: i32) -> (i32, i32) {
    %c0_i32 = arith.constant 0 : i32
    %c0_i32_0 = arith.constant 0 : i32
    %c0_i32_1 = arith.constant 0 : i32
    return %c0_i32, %c0_i32_0 : i32, i32
  }
  func.func @transform_7(%arg0: i32) -> (i32, i32) {
    %c0_i32 = arith.constant 0 : i32
    %c0_i32_0 = arith.constant 0 : i32
    return %arg0, %c0_i32 : i32, i32
  }
}

</mosaic_0001>

<llo_original>
// kernel: mlp_forward.1
$region0: #{mlp_forward.1}
  #allocation0 [shape = 'u32[]', space=smem, size = 0x4, offset = 0x4, fixed_abs, tag = 'smem constant byte address 0x4 - core index']
  #allocation1 [shape = 'u32[144,128]{1,0:T(1,128)}', space=vmem, size = 0x12000, scoped, tag = 'internal scratch']
  %s0 = inlined_call_operand.vmem [shape: f32[8,128], index: 0, kind: input, shape index: {}]
  %s1 = inlined_call_operand.vmem [shape: f32[128,128], index: 1, kind: input, shape index: {}]
  %s2 = inlined_call_operand.vmem [shape: f32[1,128], index: 2, kind: input, shape index: {}]
  %s3 = inlined_call_operand.vmem [shape: f32[128,128], index: 3, kind: input, shape index: {}]
  %s4 = inlined_call_operand.vmem [shape: f32[1,128], index: 4, kind: input, shape index: {}]
  %s5 = inlined_call_operand.vmem [shape: f32[128,128], index: 5, kind: input, shape index: {}]
  %s6 = inlined_call_operand.vmem [shape: f32[1,128], index: 6, kind: input, shape index: {}]
  %s7 = inlined_call_operand.vmem [shape: f32[8,128], index: 7, kind: output, shape index: {}]
  %s8 = sld [smem:[#allocation0]]
  $region38: #{mlp_forward.1} parent=0
    _
  %s10 = ssub.s32 1, %s8
  %s11 = scalar_select 0, %s10, %s8
  // Predicated region
  $region2: #{mlp_forward.1} parent=0 // pred_check
    _
  $region3: #{mlp_forward.1} parent=0 // pred_check_branch
    %13 = sbr.rel (0) target = $region5
  $region4: #{mlp_forward.1} parent=0 // pred_region
    _
  $region5: #{mlp_forward.1} parent=0 // pred_fallthru
    _
  // Predicated region
  $region6: #{mlp_forward.1} parent=0 // pred_check
    _
  $region7: #{mlp_forward.1} parent=0 // pred_check_branch
    %15 = sbr.rel (0) target = $region9
  $region8: #{mlp_forward.1} parent=0 // pred_region
    _
  $region9: #{mlp_forward.1} parent=0 // pred_fallthru
    _
  // Predicated region
  $region10: #{mlp_forward.1} parent=0 // pred_check
    _
  $region11: #{mlp_forward.1} parent=0 // pred_check_branch
    %17 = sbr.rel (0) target = $region13
  $region12: #{mlp_forward.1} parent=0 // pred_region
    _
  $region13: #{mlp_forward.1} parent=0 // pred_fallthru
    _
  // Predicated region
  $region14: #{mlp_forward.1} parent=0 // pred_check
    _
  $region15: #{mlp_forward.1} parent=0 // pred_check_branch
    %19 = sbr.rel (0) target = $region17
  $region16: #{mlp_forward.1} parent=0 // pred_region
    _
  $region17: #{mlp_forward.1} parent=0 // pred_fallthru
    _
  // Predicated region
  $region18: #{mlp_forward.1} parent=0 // pred_check
    _
  $region19: #{mlp_forward.1} parent=0 // pred_check_branch
    %21 = sbr.rel (0) target = $region21
  $region20: #{mlp_forward.1} parent=0 // pred_region
    _
  $region21: #{mlp_forward.1} parent=0 // pred_fallthru
    _
  // Predicated region
  $region22: #{mlp_forward.1} parent=0 // pred_check
    _
  $region23: #{mlp_forward.1} parent=0 // pred_check_branch
    %23 = sbr.rel (0) target = $region25
  $region24: #{mlp_forward.1} parent=0 // pred_region
    _
  $region25: #{mlp_forward.1} parent=0 // pred_fallthru
    _
  // Predicated region
  $region26: #{mlp_forward.1} parent=0 // pred_check
    _
  $region27: #{mlp_forward.1} parent=0 // pred_check_branch
    %25 = sbr.rel (0) target = $region29
  $region28: #{mlp_forward.1} parent=0 // pred_region
    _
  $region29: #{mlp_forward.1} parent=0 // pred_fallthru
    _
  %v26 = vld [vmem:[%s0] sm:$0xff]
  %v27 = vld [vmem:[%s1] sm:$0xff]
  %v28 = vld [vmem:[%s1 + $0x8] sm:$0xff]
  %v29 = vld [vmem:[%s1 + $0x10] sm:$0xff]
  %v30 = vld [vmem:[%s1 + $0x18] sm:$0xff]
  %v31 = vld [vmem:[%s1 + $0x20] sm:$0xff]
  %v32 = vld [vmem:[%s1 + $0x28] sm:$0xff]
  %v33 = vld [vmem:[%s1 + $0x30] sm:$0xff]
  %v34 = vld [vmem:[%s1 + $0x38] sm:$0xff]
  %v35 = vld [vmem:[%s1 + $0x40] sm:$0xff]
  %v36 = vld [vmem:[%s1 + $0x48] sm:$0xff]
  %v37 = vld [vmem:[%s1 + $0x50] sm:$0xff]
  %v38 = vld [vmem:[%s1 + $0x58] sm:$0xff]
  %v39 = vld [vmem:[%s1 + $0x60] sm:$0xff]
  %v40 = vld [vmem:[%s1 + $0x68] sm:$0xff]
  %v41 = vld [vmem:[%s1 + $0x70] sm:$0xff]
  %v42 = vld [vmem:[%s1 + $0x78] sm:$0xff]
  %v43 = vld [vmem:[%s2] sm:$0x1]
  %v45 = vlaneseq
  %v46 = vshrl.u32 %v45, 7
  %v47 = vsub.s32 0, %v46
  %v48 = vrot.slane %v43, %v47
  %50 = vmatprep.subr.mxu0 0.0
  %51 = vmatpush1.msra.mxu0 %v27
  %52 = vmatprep.subr.mxu0 0.0
  %53 = vmatpush1.msra.mxu0 %v28
  %54 = vmatprep.subr.mxu0 0.0
  %55 = vmatpush1.msra.mxu0 %v29
  %56 = vmatprep.subr.mxu0 0.0
  %57 = vmatpush1.msra.mxu0 %v30
  %58 = vmatprep.subr.mxu0 0.0
  %59 = vmatpush1.msra.mxu0 %v31
  %60 = vmatprep.subr.mxu0 0.0
  %61 = vmatpush1.msra.mxu0 %v32
  %62 = vmatprep.subr.mxu0 0.0
  %63 = vmatpush1.msra.mxu0 %v33
  %64 = vmatprep.subr.mxu0 0.0
  %65 = vmatpush1.msra.mxu0 %v34
  %66 = vmatprep.subr.mxu0 0.0
  %67 = vmatpush1.msra.mxu0 %v35
  %68 = vmatprep.subr.mxu0 0.0
  %69 = vmatpush1.msra.mxu0 %v36
  %70 = vmatprep.subr.mxu0 0.0
  %71 = vmatpush1.msra.mxu0 %v37
  %72 = vmatprep.subr.mxu0 0.0
  %73 = vmatpush1.msra.mxu0 %v38
  %74 = vmatprep.subr.mxu0 0.0
  %75 = vmatpush1.msra.mxu0 %v39
  %76 = vmatprep.subr.mxu0 0.0
  %77 = vmatpush1.msra.mxu0 %v40
  %78 = vmatprep.subr.mxu0 0.0
  %79 = vmatpush1.msra.mxu0 %v41
  %80 = vmatprep.subr.mxu0 0.0
  %81 = vmatpush1.msra.mxu0 %v42
  %82 = vmatprep.subr.mxu0 0.0
  %83 = vmatpush1.msra.mxu0 0.0
  %84 = vmatprep.subr.mxu0 0.0
  %85 = vmatpush1.msra.mxu0 0.0
  %86 = vmatprep.subr.mxu0 0.0
  %87 = vmatpush1.msra.mxu0 0.0
  %88 = vmatprep.subr.mxu0 0.0
  %89 = vmatpush1.msra.mxu0 0.0
  %90 = vmatprep.subr.mxu0 0.0
  %91 = vmatpush1.msra.mxu0 0.0
  %92 = vmatprep.subr.mxu0 0.0
  %93 = vmatpush1.msra.mxu0 0.0
  %94 = vmatprep.subr.mxu0 0.0
  %95 = vmatpush1.msra.mxu0 0.0
  %96 = vmatprep.subr.mxu0 0.0
  %97 = vmatpush1.msra.mxu0 0.0
  %98 = vmatprep.subr.mxu0 0.0
  %99 = vmatpush1.msra.mxu0 0.0
  %100 = vmatprep.subr.mxu0 0.0
  %101 = vmatpush1.msra.mxu0 0.0
  %102 = vmatprep.subr.mxu0 0.0
  %103 = vmatpush1.msra.mxu0 0.0
  %104 = vmatprep.subr.mxu0 0.0
  %105 = vmatpush1.msra.mxu0 0.0
  %106 = vmatprep.subr.mxu0 0.0
  %107 = vmatpush1.msra.mxu0 0.0
  %108 = vmatprep.subr.mxu0 0.0
  %109 = vmatpush1.msra.mxu0 0.0
  %110 = vmatprep.subr.mxu0 0.0
  %111 = vmatpush1.msra.mxu0 0.0
  %112 = vmatprep.subr.mxu0 0.0
  %113 = vmatpush1.msra.mxu0 0.0
  %114 = vmatprep.mubr.f32.mxu0 0.0
  %115 = vmatmul.mubr.f32.gmra.mrb[0].mxu0 %v26
  %v116 = vpop.f32.mrb[0].mxu0
  %v117 = vadd.f32 %v48, %v116
  %v118 = vpop.f32.mrb[0].mxu0
  %119 = vdwg.mxu0
  %v120 = vtanh.pop %v117
  %v121 = vld [vmem:[%s3] sm:$0xff]
  %v122 = vld [vmem:[%s3 + $0x8] sm:$0xff]
  %v123 = vld [vmem:[%s3 + $0x10] sm:$0xff]
  %v124 = vld [vmem:[%s3 + $0x18] sm:$0xff]
  %v125 = vld [vmem:[%s3 + $0x20] sm:$0xff]
  %v126 = vld [vmem:[%s3 + $0x28] sm:$0xff]
  %v127 = vld [vmem:[%s3 + $0x30] sm:$0xff]
  %v128 = vld [vmem:[%s3 + $0x38] sm:$0xff]
  %v129 = vld [vmem:[%s3 + $0x40] sm:$0xff]
  %v130 = vld [vmem:[%s3 + $0x48] sm:$0xff]
  %v131 = vld [vmem:[%s3 + $0x50] sm:$0xff]
  %v132 = vld [vmem:[%s3 + $0x58] sm:$0xff]
  %v133 = vld [vmem:[%s3 + $0x60] sm:$0xff]
  %v134 = vld [vmem:[%s3 + $0x68] sm:$0xff]
  %v135 = vld [vmem:[%s3 + $0x70] sm:$0xff]
  %v136 = vld [vmem:[%s3 + $0x78] sm:$0xff]
  %v137 = vld [vmem:[%s4] sm:$0x1]
  %v139 = vlaneseq
  %v140 = vshrl.u32 %v139, 7
  %v141 = vsub.s32 0, %v140
  %v142 = vrot.slane %v137, %v141
  %144 = vmatprep.subr.mxu0 0.0
  %145 = vmatpush1.msra.mxu0 %v121
  %146 = vmatprep.subr.mxu0 0.0
  %147 = vmatpush1.msra.mxu0 %v122
  %148 = vmatprep.subr.mxu0 0.0
  %149 = vmatpush1.msra.mxu0 %v123
  %150 = vmatprep.subr.mxu0 0.0
  %151 = vmatpush1.msra.mxu0 %v124
  %152 = vmatprep.subr.mxu0 0.0
  %153 = vmatpush1.msra.mxu0 %v125
  %154 = vmatprep.subr.mxu0 0.0
  %155 = vmatpush1.msra.mxu0 %v126
  %156 = vmatprep.subr.mxu0 0.0
  %157 = vmatpush1.msra.mxu0 %v127
  %158 = vmatprep.subr.mxu0 0.0
  %159 = vmatpush1.msra.mxu0 %v128
  %160 = vmatprep.subr.mxu0 0.0
  %161 = vmatpush1.msra.mxu0 %v129
  %162 = vmatprep.subr.mxu0 0.0
  %163 = vmatpush1.msra.mxu0 %v130
  %164 = vmatprep.subr.mxu0 0.0
  %165 = vmatpush1.msra.mxu0 %v131
  %166 = vmatprep.subr.mxu0 0.0
  %167 = vmatpush1.msra.mxu0 %v132
  %168 = vmatprep.subr.mxu0 0.0
  %169 = vmatpush1.msra.mxu0 %v133
  %170 = vmatprep.subr.mxu0 0.0
  %171 = vmatpush1.msra.mxu0 %v134
  %172 = vmatprep.subr.mxu0 0.0
  %173 = vmatpush1.msra.mxu0 %v135
  %174 = vmatprep.subr.mxu0 0.0
  %175 = vmatpush1.msra.mxu0 %v136
  %176 = vmatprep.subr.mxu0 0.0
  %177 = vmatpush1.msra.mxu0 0.0
  %178 = vmatprep.subr.mxu0 0.0
  %179 = vmatpush1.msra.mxu0 0.0
  %180 = vmatprep.subr.mxu0 0.0
  %181 = vmatpush1.msra.mxu0 0.0
  %182 = vmatprep.subr.mxu0 0.0
  %183 = vmatpush1.msra.mxu0 0.0
  %184 = vmatprep.subr.mxu0 0.0
  %185 = vmatpush1.msra.mxu0 0.0
  %186 = vmatprep.subr.mxu0 0.0
  %187 = vmatpush1.msra.mxu0 0.0
  %188 = vmatprep.subr.mxu0 0.0
  %189 = vmatpush1.msra.mxu0 0.0
  %190 = vmatprep.subr.mxu0 0.0
  %191 = vmatpush1.msra.mxu0 0.0
  %192 = vmatprep.subr.mxu0 0.0
  %193 = vmatpush1.msra.mxu0 0.0
  %194 = vmatprep.subr.mxu0 0.0
  %195 = vmatpush1.msra.mxu0 0.0
  %196 = vmatprep.subr.mxu0 0.0
  %197 = vmatpush1.msra.mxu0 0.0
  %198 = vmatprep.subr.mxu0 0.0
  %199 = vmatpush1.msra.mxu0 0.0
  %200 = vmatprep.subr.mxu0 0.0
  %201 = vmatpush1.msra.mxu0 0.0
  %202 = vmatprep.subr.mxu0 0.0
  %203 = vmatpush1.msra.mxu0 0.0
  %204 = vmatprep.subr.mxu0 0.0
  %205 = vmatpush1.msra.mxu0 0.0
  %206 = vmatprep.subr.mxu0 0.0
  %207 = vmatpush1.msra.mxu0 0.0
  %208 = vmatprep.mubr.f32.mxu0 0.0
  %209 = vmatmul.mubr.f32.gmra.mrb[0].mxu0 %v120
  %v210 = vpop.f32.mrb[0].mxu0
  %v211 = vadd.f32 %v142, %v210
  %v212 = vpop.f32.mrb[0].mxu0
  %213 = vdwg.mxu0
  %v214 = vtanh.pop %v211
  %v215 = vld [vmem:[%s5] sm:$0xff]
  %v216 = vld [vmem:[%s5 + $0x8] sm:$0xff]
  %v217 = vld [vmem:[%s5 + $0x10] sm:$0xff]
  %v218 = vld [vmem:[%s5 + $0x18] sm:$0xff]
  %v219 = vld [vmem:[%s5 + $0x20] sm:$0xff]
  %v220 = vld [vmem:[%s5 + $0x28] sm:$0xff]
  %v221 = vld [vmem:[%s5 + $0x30] sm:$0xff]
  %v222 = vld [vmem:[%s5 + $0x38] sm:$0xff]
  %v223 = vld [vmem:[%s5 + $0x40] sm:$0xff]
  %v224 = vld [vmem:[%s5 + $0x48] sm:$0xff]
  %v225 = vld [vmem:[%s5 + $0x50] sm:$0xff]
  %v226 = vld [vmem:[%s5 + $0x58] sm:$0xff]
  %v227 = vld [vmem:[%s5 + $0x60] sm:$0xff]
  %v228 = vld [vmem:[%s5 + $0x68] sm:$0xff]
  %v229 = vld [vmem:[%s5 + $0x70] sm:$0xff]
  %v230 = vld [vmem:[%s5 + $0x78] sm:$0xff]
  %v231 = vld [vmem:[%s6] sm:$0x1]
  %v233 = vlaneseq
  %v234 = vshrl.u32 %v233, 7
  %v235 = vsub.s32 0, %v234
  %v236 = vrot.slane %v231, %v235
  %238 = vmatprep.subr.mxu0 0.0
  %239 = vmatpush1.msra.mxu0 %v215
  %240 = vmatprep.subr.mxu0 0.0
  %241 = vmatpush1.msra.mxu0 %v216
  %242 = vmatprep.subr.mxu0 0.0
  %243 = vmatpush1.msra.mxu0 %v217
  %244 = vmatprep.subr.mxu0 0.0
  %245 = vmatpush1.msra.mxu0 %v218
  %246 = vmatprep.subr.mxu0 0.0
  %247 = vmatpush1.msra.mxu0 %v219
  %248 = vmatprep.subr.mxu0 0.0
  %249 = vmatpush1.msra.mxu0 %v220
  %250 = vmatprep.subr.mxu0 0.0
  %251 = vmatpush1.msra.mxu0 %v221
  %252 = vmatprep.subr.mxu0 0.0
  %253 = vmatpush1.msra.mxu0 %v222
  %254 = vmatprep.subr.mxu0 0.0
  %255 = vmatpush1.msra.mxu0 %v223
  %256 = vmatprep.subr.mxu0 0.0
  %257 = vmatpush1.msra.mxu0 %v224
  %258 = vmatprep.subr.mxu0 0.0
  %259 = vmatpush1.msra.mxu0 %v225
  %260 = vmatprep.subr.mxu0 0.0
  %261 = vmatpush1.msra.mxu0 %v226
  %262 = vmatprep.subr.mxu0 0.0
  %263 = vmatpush1.msra.mxu0 %v227
  %264 = vmatprep.subr.mxu0 0.0
  %265 = vmatpush1.msra.mxu0 %v228
  %266 = vmatprep.subr.mxu0 0.0
  %267 = vmatpush1.msra.mxu0 %v229
  %268 = vmatprep.subr.mxu0 0.0
  %269 = vmatpush1.msra.mxu0 %v230
  %270 = vmatprep.subr.mxu0 0.0
  %271 = vmatpush1.msra.mxu0 0.0
  %272 = vmatprep.subr.mxu0 0.0
  %273 = vmatpush1.msra.mxu0 0.0
  %274 = vmatprep.subr.mxu0 0.0
  %275 = vmatpush1.msra.mxu0 0.0
  %276 = vmatprep.subr.mxu0 0.0
  %277 = vmatpush1.msra.mxu0 0.0
  %278 = vmatprep.subr.mxu0 0.0
  %279 = vmatpush1.msra.mxu0 0.0
  %280 = vmatprep.subr.mxu0 0.0
  %281 = vmatpush1.msra.mxu0 0.0
  %282 = vmatprep.subr.mxu0 0.0
  %283 = vmatpush1.msra.mxu0 0.0
  %284 = vmatprep.subr.mxu0 0.0
  %285 = vmatpush1.msra.mxu0 0.0
  %286 = vmatprep.subr.mxu0 0.0
  %287 = vmatpush1.msra.mxu0 0.0
  %288 = vmatprep.subr.mxu0 0.0
  %289 = vmatpush1.msra.mxu0 0.0
  %290 = vmatprep.subr.mxu0 0.0
  %291 = vmatpush1.msra.mxu0 0.0
  %292 = vmatprep.subr.mxu0 0.0
  %293 = vmatpush1.msra.mxu0 0.0
  %294 = vmatprep.subr.mxu0 0.0
  %295 = vmatpush1.msra.mxu0 0.0
  %296 = vmatprep.subr.mxu0 0.0
  %297 = vmatpush1.msra.mxu0 0.0
  %298 = vmatprep.subr.mxu0 0.0
  %299 = vmatpush1.msra.mxu0 0.0
  %300 = vmatprep.subr.mxu0 0.0
  %301 = vmatpush1.msra.mxu0 0.0
  %302 = vmatprep.mubr.f32.mxu0 0.0
  %303 = vmatmul.mubr.f32.gmra.mrb[0].mxu0 %v214
  %v304 = vpop.f32.mrb[0].mxu0
  %v305 = vadd.f32 %v236, %v304
  %v306 = vpop.f32.mrb[0].mxu0
  %307 = vdwg.mxu0
  %308 = vst [vmem:[%s7] sm:$0xff] %v305
  // Predicated region
  $region30: #{mlp_forward.1} parent=0 // pred_check
    _
  $region31: #{mlp_forward.1} parent=0 // pred_check_branch
    %310 = sbr.rel (0) target = $region33
  $region32: #{mlp_forward.1} parent=0 // pred_region
    _
  $region33: #{mlp_forward.1} parent=0 // pred_fallthru
    _
  // Predicated region
  $region34: #{mlp_forward.1} parent=0 // pred_check
    _
  $region35: #{mlp_forward.1} parent=0 // pred_check_branch
    %312 = sbr.rel (0) target = $region37
  $region36: #{mlp_forward.1} parent=0 // pred_region
    _
  $region37: #{mlp_forward.1} parent=0 // pred_fallthru
    _

</llo_original>
